<compile_context>
chip_gen: v7x
topology: tpu7x:2x2x1
jax: 0.10.0
libtpu: 0.0.40
codegen_flags: <defaults>
</compile_context>

<pallas_src>
import functools
import math

import jax
import jax.numpy as jnp
from jax.experimental import pallas as pl
from jax.experimental.pallas import tpu as pltpu


_ARTANH_MAX = 0.5 * math.log((2.0 - 1e-5) / 1e-5)   # artanh(1 - 1e-5)


# ---------------------------------------------------------------------------
# In-kernel math helpers.
# ---------------------------------------------------------------------------
def _artanh(x):
    # torch: clamp(-1+1e-5, 1-1e-5); single-log form halves EUP log traffic.
    x = jnp.clip(x, -1.0 + 1e-5, 1.0 - 1e-5)
    return 0.5 * jnp.log((1.0 + x) / (1.0 - x))


def _tanh(x, clamp=15.0):
    return jnp.tanh(jnp.clip(x, -clamp, clamp))


def _norm_and_inv(sumsq, min_norm):
    """(norm, 1/norm) with norm = max(sqrt(sumsq), min_norm), via one rsqrt."""
    r = jax.lax.rsqrt(jnp.maximum(sumsq, min_norm * min_norm))
    norm = jnp.maximum(sumsq * r, min_norm)
    inv = jnp.minimum(r, 1.0 / min_norm)
    return norm, inv


def _round_up(n, m):
    return ((n + m - 1) // m) * m


# ---------------------------------------------------------------------------
# Pallas kernel: one (tm, D) row tile of x; weight resident in VMEM.
#   block_diag=True : wt_ref is (r, blk, blk) = W_i^T per block; mx goes to scratch.
#   block_diag=False: wt_ref is (D, D) = block_diag(W)^T (dense).
# ---------------------------------------------------------------------------
def _block_diag_hyperbolic_kernel(x_ref, wt_ref, o_ref, *scratch, curvature, r,
                                  blk, block_diag, matmul_dtype):
    sc = curvature ** 0.5
    inv_sc = 1.0 / sc
    maxnorm = (1.0 - 1e-3) * inv_sc

    x = x_ref[...].astype(jnp.float32)                        # (tm, D)

    # ---- expmap0 (Poincare ball): h = tanh(sc*|x|) * x / (sc*|x|) ----
    u_norm, inv_u = _norm_and_inv(
        jnp.sum(x * x, axis=-1, keepdims=True), 1e-5)         # (tm, 1)
    t_u = _tanh(sc * u_norm)                                  # (tm, 1)
    h = x * (t_u * inv_u * inv_sc)                            # (tm, D)

    # Analytic ||h|| (no second (tm, D) reduction): ||h|| = tanh(sc*|x|)/sc, clamped at
    # 1e-5 like the reference, and artanh(sc*x_norm) = min(sc*|x|, artanh(1-1e-5)).
    inv_xn = sc / jnp.maximum(t_u, sc * 1e-5)                 # 1 / max(||h||, 1e-5)
    artanh_term = jnp.minimum(sc * u_norm, _ARTANH_MAX)       # (tm, 1)

    # ---- mx = h @ block_diag(W).T  (weight already transposed on host) ----
    h_mm = h if matmul_dtype is None else h.astype(matmul_dtype)
    if block_diag:
        mx_ref = scratch[0]                                   # (tm, D) f32 VMEM
        mx_sumsq = jnp.zeros_like(t_u)
        for i in range(r):  # static unroll; r independent (tm,blk)x(blk,blk) MXU dots
            b = jnp.dot(h_mm[:, i * blk:(i + 1) * blk],
                        wt_ref[i].astype(h_mm.dtype),
                        preferred_element_type=jnp.float32)
            mx_ref[:, i * blk:(i + 1) * blk] = b              # 128-lane-aligned slice
            mx_sumsq = mx_sumsq + jnp.sum(b * b, axis=-1, keepdims=True)
    else:
        mx = jnp.dot(h_mm, wt_ref[...].astype(h_mm.dtype),
                     preferred_element_type=jnp.float32)      # (tm, D)
        mx_sumsq = jnp.sum(mx * mx, axis=-1, keepdims=True)

    # ---- mobius_matvec epilogue ----
    inv_mxn = jax.lax.rsqrt(jnp.maximum(mx_sumsq, 1e-30))     # eps-clamped
    mx_norm = mx_sumsq * inv_mxn                              # ~= |mx| (0 when mx==0)

    t1 = _tanh(mx_norm * inv_xn * artanh_term)                # >= 0
    res_scale = t1 * inv_mxn * inv_sc                         # res_c = mx * res_scale
    res_norm = t1 * inv_sc                                    # == |res_c| analytically

    # ---- _project + logmap0, folded into per-row scales ----
    norm = jnp.maximum(res_norm, 1e-5)
    y_norm = jnp.minimum(norm, maxnorm)                       # norm after projection
    proj_scale = jnp.where(norm > maxnorm, maxnorm / norm, 1.0)
    log_scale = _artanh(sc * y_norm) / (sc * y_norm)

    row_scale = res_scale * proj_scale * log_scale            # (tm, 1)
    # Fold the zero-row (and zero-padding) mask into the scale: one (tm, D) multiply.
    row_scale = jnp.where(mx_sumsq == 0.0, 0.0, row_scale)

    if block_diag:
        o_ref[...] = (mx_ref[...] * row_scale).astype(o_ref.dtype)
    else:
        o_ref[...] = (mx * row_scale).astype(o_ref.dtype)


# ---------------------------------------------------------------------------
# Wrapper.
# ---------------------------------------------------------------------------
def _vmem_capacity_bytes():
    try:
        info = pltpu.get_tpu_info()
        for name in ("vmem_capacity_bytes", "vmem_bytes"):
            cap = getattr(info, name, None)
            if cap:
                return int(cap)
    except Exception:
        pass
    return 64 << 20   # conservative fallback (v7x per-TensorCore)


def block_diagonal_linear(x, weights, curvature=2.5, tm=512, matmul_dtype=None):
    """x: (..., D); weights: (r, blk, blk) with r*blk == D (module init: identities).

    tm: requested row tile (auto-clamped to VMEM capacity and grid-step count).
    matmul_dtype: optional MXU input dtype (e.g. jnp.bfloat16, recommended on v5e);
    default None keeps the matmul in f32 for strict fidelity.
    """
    r, blk, blk2 = weights.shape
    assert blk == blk2
    D = r * blk
    assert x.shape[-1] == D, "module requires in_features == out_features"

    orig_shape = x.shape
    x2d = x.reshape(-1, D)
    M = x2d.shape[0]

    # Weight layout: factored per-block W_i^T when blocks are lane-aligned AND the
    # problem is large enough that 128-wide dots don't underfill the 256x256 MXU
    # (D > 256); otherwise densify block_diag(W)^T.
    use_block = (blk % 128 == 0) and (D > 256)
    if use_block:
        wt = jnp.transpose(weights, (0, 2, 1))                # (r, blk, blk) = W_i^T
        w_spec = pl.BlockSpec((r, blk, blk), lambda i: (0, 0, 0))
    else:
        m = jax.scipy.linalg.block_diag(*[weights[i] for i in range(r)])
        wt = jnp.transpose(m)                                 # (D, D) = block_diag(W)^T
        w_spec = pl.BlockSpec((D, D), lambda i: (0, 0))
    if matmul_dtype is not None:
        wt = wt.astype(matmul_dtype)
    w_bytes = int(wt.size) * wt.dtype.itemsize

    # ---- generation-aware tile sizing (query per-core VMEM) ----
    in_b = jnp.dtype(x.dtype).itemsize
    out_b = in_b
    # Per-row VMEM: 2x double-buffered input + 2x output tiles + ~6 f32 temps
    # (x, h, mx scratch, epilogue intermediates).
    per_row = D * (2 * in_b + 2 * out_b + 6 * 4)
    usable = int(0.8 * _vmem_capacity_bytes())     # ~51 MiB on v7x, ~102 MiB on v5e/v6e
    headroom = 2 << 20                             # Mosaic internal scratch
    tm_fit = max(8, ((usable - 2 * w_bytes - headroom) // per_row) // 8 * 8)
    # >= 4 grid steps (>= 2 for tiny M) so both v7x TensorCores get work.
    tm_steps = max(8, _round_up((M + 3) // 4, 8))
    tm = int(max(8, min(int(tm), tm_fit, tm_steps)))

    M_pad = _round_up(M, tm)
    if M_pad != M:
        x2d = jnp.pad(x2d, ((0, M_pad - M), (0, 0)))

    kernel = functools.partial(
        _block_diag_hyperbolic_kernel, curvature=float(curvature), r=r, blk=blk,
        block_diag=use_block, matmul_dtype=matmul_dtype)

    scratch_shapes = [pltpu.VMEM((tm, D), jnp.float32)] if use_block else []

    out = pl.pallas_call(
        kernel,
        out_shape=jax.ShapeDtypeStruct((M_pad, D), x.dtype),
        grid_spec=pltpu.PrefetchScalarGridSpec(
            num_scalar_prefetch=0,
            grid=(M_pad // tm,),
            in_specs=[
                pl.BlockSpec((tm, D), lambda i: (i, 0)),
                w_spec,
            ],
            out_specs=pl.BlockSpec((tm, D), lambda i: (i, 0)),
            scratch_shapes=scratch_shapes,
        ),
        compiler_params=pltpu.CompilerParams(
            dimension_semantics=("parallel",),
            vmem_limit_bytes=usable),
    )(x2d, wt)

    return out[:M].reshape(orig_shape)


# ---------------------------------------------------------------------------
# Pure-JAX reference (faithful port of the PyTorch module, sqrt/divide form).
# ---------------------------------------------------------------------------
def _l2norm(x):
    return jnp.sqrt(jnp.sum(x * x, axis=-1, keepdims=True))


def _artanh_ref(x):
    x = jnp.clip(x, -1.0 + 1e-5, 1.0 - 1e-5)
    return 0.5 * (jnp.log(1.0 + x) - jnp.log(1.0 - x))


def _reference(x, weights, curvature=2.5):
    r = weights.shape[0]
    m = jax.scipy.linalg.block_diag(*[weights[i] for i in range(r)])
    sqrt_c = curvature ** 0.5

    u_norm = jnp.maximum(_l2norm(x), 1e-5)
    h = _tanh(sqrt_c * u_norm) * x / (sqrt_c * u_norm)

    x_norm = jnp.maximum(_l2norm(h), 1e-5)
    mx = h @ m.T
    mx_norm = _l2norm(mx)
    res_c = _tanh(mx_norm / x_norm * _artanh_ref(sqrt_c * x_norm)) * mx / (mx_norm * sqrt_c)
    cond = jnp.all(mx == 0.0, axis=-1, keepdims=True)
    res = jnp.where(cond, jnp.zeros_like(res_c), res_c)

    norm = jnp.maximum(_l2norm(res), 1e-5)
    maxnorm = (1.0 - 1e-3) / sqrt_c
    res = jnp.where(norm > maxnorm, res / norm * maxnorm, res)

    y_norm = jnp.maximum(_l2norm(res), 1e-5)
    return res / y_norm / sqrt_c * _artanh_ref(sqrt_c * y_norm)


if __name__ == "__main__":
    B, S = 2, 8
    curvature = 2.5
    key = jax.random.PRNGKey(0)

    def _check(out, ref, shape):
        assert out.shape == shape
        assert bool(jnp.all(jnp.isfinite(out)))
        # artanh near the ball boundary amplifies ulp-level differences ~500x, so the
        # rsqrt / analytic-norm kernel is compared at 5e-4 (observed max diff ~1e-4).
        assert jnp.allclose(out, ref, atol=5e-4, rtol=5e-4), \
            float(jnp.max(jnp.abs(out - ref)))

    # --- Test 1: module's small config (blk=8 -> dense-weight path). ---
    D, blk = 32, 8
    r = D // blk
    x = jax.random.normal(key, (B, S, D), dtype=jnp.float32)
    weights = jnp.stack([jnp.eye(blk, dtype=jnp.float32) for _ in range(r)])  # module init
    out = jax.block_until_ready(block_diagonal_linear(x, weights, curvature=curvature))
    _check(out, _reference(x, weights, curvature=curvature), (B, S, D))

    # --- Test 2: lane-aligned blocks, D=256 -> dense path (fills 256x256 MXU). ---
    D2, blk2 = 256, 128
    r2 = D2 // blk2
    k1, k2 = jax.random.split(key)
    x2 = jax.random.normal(k1, (B, S, D2), dtype=jnp.float32)
    w2 = (jnp.stack([jnp.eye(blk2, dtype=jnp.float32) for _ in range(r2)])
          + 0.05 * jax.random.normal(k2, (r2, blk2, blk2), dtype=jnp.float32))
    out2 = jax.block_until_ready(block_diagonal_linear(x2, w2, curvature=curvature))
    _check(out2, _reference(x2, w2, curvature=curvature), (B, S, D2))

    # --- Test 3: D=512, blk=128 -> factored block-diagonal path (VMEM mx scratch). ---
    D3, blk3 = 512, 128
    r3 = D3 // blk3
    k3, k4 = jax.random.split(k2)
    x3 = jax.random.normal(k3, (B, S, D3), dtype=jnp.float32)
    w3 = (jnp.stack([jnp.eye(blk3, dtype=jnp.float32) for _ in range(r3)])
          + 0.05 * jax.random.normal(k4, (r3, blk3, blk3), dtype=jnp.float32))
    out3 = jax.block_until_ready(block_diagonal_linear(x3, w3, curvature=curvature))
    _check(out3, _reference(x3, w3, curvature=curvature), (B, S, D3))

    print("KERNEL_OK")
</pallas_src>

<mosaic_0001>
module attributes {stable_mosaic.version = 11 : i64} {
  func.func @_block_diag_hyperbolic_kernel(%arg0: i32, %arg1: memref<8x32xf32, #tpu.memory_space<vmem>>, %arg2: memref<32x32xf32, #tpu.memory_space<vmem>>, %arg3: memref<8x32xf32, #tpu.memory_space<vmem>>) attributes {dimension_semantics = [#tpu.dimension_semantics<parallel>], iteration_bounds = array<i64: 2>, scalar_prefetch = 0 : i64, scratch_operands = 0 : i64, tpu.core_type = #tpu.core_type<tc>, window_params = [{transform_indices = @transform_0, window_bounds = array<i64: 8, 32>}, {pipeline_mode = #tpu.pipeline_mode<synchronous>, transform_indices = @transform_1, window_bounds = array<i64: 32, 32>}, {transform_indices = @transform_2, window_bounds = array<i64: 8, 32>}]} {
    %c0 = arith.constant 0 : index
    %c0_0 = arith.constant 0 : index
    %0 = vector.load %arg1[%c0, %c0_0] : memref<8x32xf32, #tpu.memory_space<vmem>>, vector<8x32xf32>
    %1 = arith.mulf %0, %0 : vector<8x32xf32>
    %cst = arith.constant dense<0.000000e+00> : vector<8xf32>
    %2 = vector.multi_reduction <add>, %1, %cst [1] : vector<8x32xf32> to vector<8xf32>
    %3 = vector.shape_cast %2 : vector<8xf32> to vector<8x1xf32>
    %cst_1 = arith.constant 1.000000e-10 : f32
    %4 = vector.broadcast %cst_1 : f32 to vector<8x1xf32>
    %5 = arith.maximumf %3, %4 : vector<8x1xf32>
    %6 = math.rsqrt %5 : vector<8x1xf32>
    %7 = arith.mulf %3, %6 : vector<8x1xf32>
    %cst_2 = arith.constant 9.99999974E-6 : f32
    %8 = vector.broadcast %cst_2 : f32 to vector<8x1xf32>
    %9 = arith.maximumf %7, %8 : vector<8x1xf32>
    %cst_3 = arith.constant 1.000000e+05 : f32
    %10 = vector.broadcast %cst_3 : f32 to vector<8x1xf32>
    %11 = arith.minimumf %6, %10 : vector<8x1xf32>
    %cst_4 = arith.constant 1.58113885 : f32
    %12 = vector.broadcast %cst_4 : f32 to vector<8x1xf32>
    %13 = arith.mulf %12, %9 : vector<8x1xf32>
    %cst_5 = arith.constant -1.500000e+01 : f32
    %cst_6 = arith.constant 1.500000e+01 : f32
    %14 = vector.broadcast %cst_5 : f32 to vector<8x1xf32>
    %15 = arith.maximumf %14, %13 : vector<8x1xf32>
    %16 = vector.broadcast %cst_6 : f32 to vector<8x1xf32>
    %17 = arith.minimumf %16, %15 : vector<8x1xf32>
    %18 = math.tanh %17 : vector<8x1xf32>
    %19 = arith.mulf %18, %11 : vector<8x1xf32>
    %cst_7 = arith.constant 0.632455527 : f32
    %20 = vector.broadcast %cst_7 : f32 to vector<8x1xf32>
    %21 = arith.mulf %19, %20 : vector<8x1xf32>
    %22 = vector.broadcast %21 : vector<8x1xf32> to vector<8x32xf32>
    %23 = arith.mulf %0, %22 : vector<8x32xf32>
    %cst_8 = arith.constant 1.58113889E-5 : f32
    %24 = vector.broadcast %cst_8 : f32 to vector<8x1xf32>
    %25 = arith.maximumf %18, %24 : vector<8x1xf32>
    %cst_9 = arith.constant 1.58113885 : f32
    %26 = vector.broadcast %cst_9 : f32 to vector<8x1xf32>
    %27 = arith.divf %26, %25 : vector<8x1xf32>
    %cst_10 = arith.constant 1.58113885 : f32
    %28 = vector.broadcast %cst_10 : f32 to vector<8x1xf32>
    %29 = arith.mulf %28, %9 : vector<8x1xf32>
    %cst_11 = arith.constant 6.10303401 : f32
    %30 = vector.broadcast %cst_11 : f32 to vector<8x1xf32>
    %31 = arith.minimumf %29, %30 : vector<8x1xf32>
    %c0_12 = arith.constant 0 : index
    %c0_13 = arith.constant 0 : index
    %32 = vector.load %arg2[%c0_12, %c0_13] : memref<32x32xf32, #tpu.memory_space<vmem>>, vector<32x32xf32>
    %cst_14 = arith.constant dense<0.000000e+00> : vector<8x32xf32>
    %33 = tpu.matmul %23, %32, %cst_14 {dimension_numbers = #tpu.dot_dimension_numbers<[1], [0], [0], [1], [0, 0, 1, 1], [], []>} : vector<8x32xf32>, vector<32x32xf32>, vector<8x32xf32> -> vector<8x32xf32>
    %34 = arith.mulf %33, %33 : vector<8x32xf32>
    %cst_15 = arith.constant dense<0.000000e+00> : vector<8xf32>
    %35 = vector.multi_reduction <add>, %34, %cst_15 [1] : vector<8x32xf32> to vector<8xf32>
    %36 = vector.shape_cast %35 : vector<8xf32> to vector<8x1xf32>
    %cst_16 = arith.constant 1.000000e-30 : f32
    %37 = vector.broadcast %cst_16 : f32 to vector<8x1xf32>
    %38 = arith.maximumf %36, %37 : vector<8x1xf32>
    %39 = math.rsqrt %38 : vector<8x1xf32>
    %40 = arith.mulf %36, %39 : vector<8x1xf32>
    %41 = arith.mulf %40, %27 : vector<8x1xf32>
    %42 = arith.mulf %41, %31 : vector<8x1xf32>
    %cst_17 = arith.constant -1.500000e+01 : f32
    %cst_18 = arith.constant 1.500000e+01 : f32
    %43 = vector.broadcast %cst_17 : f32 to vector<8x1xf32>
    %44 = arith.maximumf %43, %42 : vector<8x1xf32>
    %45 = vector.broadcast %cst_18 : f32 to vector<8x1xf32>
    %46 = arith.minimumf %45, %44 : vector<8x1xf32>
    %47 = math.tanh %46 : vector<8x1xf32>
    %48 = arith.mulf %47, %39 : vector<8x1xf32>
    %cst_19 = arith.constant 0.632455527 : f32
    %49 = vector.broadcast %cst_19 : f32 to vector<8x1xf32>
    %50 = arith.mulf %48, %49 : vector<8x1xf32>
    %cst_20 = arith.constant 0.632455527 : f32
    %51 = vector.broadcast %cst_20 : f32 to vector<8x1xf32>
    %52 = arith.mulf %47, %51 : vector<8x1xf32>
    %cst_21 = arith.constant 9.99999974E-6 : f32
    %53 = vector.broadcast %cst_21 : f32 to vector<8x1xf32>
    %54 = arith.maximumf %52, %53 : vector<8x1xf32>
    %cst_22 = arith.constant 0.631823062 : f32
    %55 = vector.broadcast %cst_22 : f32 to vector<8x1xf32>
    %56 = arith.minimumf %54, %55 : vector<8x1xf32>
    %cst_23 = arith.constant 0.631823062 : f32
    %57 = vector.broadcast %cst_23 : f32 to vector<8x1xf32>
    %58 = arith.cmpf ogt, %54, %57 : vector<8x1xf32>
    %cst_24 = arith.constant 0.631823062 : f32
    %59 = vector.broadcast %cst_24 : f32 to vector<8x1xf32>
    %60 = arith.divf %59, %54 : vector<8x1xf32>
    %cst_25 = arith.constant 1.000000e+00 : f32
    %61 = vector.broadcast %cst_25 : f32 to vector<8x1xf32>
    %62 = arith.select %58, %60, %61 : vector<8x1xi1>, vector<8x1xf32>
    %cst_26 = arith.constant 1.58113885 : f32
    %63 = vector.broadcast %cst_26 : f32 to vector<8x1xf32>
    %64 = arith.mulf %63, %56 : vector<8x1xf32>
    %cst_27 = arith.constant -0.999989986 : f32
    %cst_28 = arith.constant 0.999989986 : f32
    %65 = vector.broadcast %cst_27 : f32 to vector<8x1xf32>
    %66 = arith.maximumf %65, %64 : vector<8x1xf32>
    %67 = vector.broadcast %cst_28 : f32 to vector<8x1xf32>
    %68 = arith.minimumf %67, %66 : vector<8x1xf32>
    %cst_29 = arith.constant 1.000000e+00 : f32
    %69 = vector.broadcast %cst_29 : f32 to vector<8x1xf32>
    %70 = arith.addf %69, %68 : vector<8x1xf32>
    %cst_30 = arith.constant 1.000000e+00 : f32
    %71 = vector.broadcast %cst_30 : f32 to vector<8x1xf32>
    %72 = arith.subf %71, %68 : vector<8x1xf32>
    %73 = arith.divf %70, %72 : vector<8x1xf32>
    %74 = math.log %73 : vector<8x1xf32>
    %cst_31 = arith.constant 5.000000e-01 : f32
    %75 = vector.broadcast %cst_31 : f32 to vector<8x1xf32>
    %76 = arith.mulf %75, %74 : vector<8x1xf32>
    %cst_32 = arith.constant 1.58113885 : f32
    %77 = vector.broadcast %cst_32 : f32 to vector<8x1xf32>
    %78 = arith.mulf %77, %56 : vector<8x1xf32>
    %79 = arith.divf %76, %78 : vector<8x1xf32>
    %80 = arith.mulf %50, %62 : vector<8x1xf32>
    %81 = arith.mulf %80, %79 : vector<8x1xf32>
    %cst_33 = arith.constant 0.000000e+00 : f32
    %82 = vector.broadcast %cst_33 : f32 to vector<8x1xf32>
    %83 = arith.cmpf oeq, %36, %82 : vector<8x1xf32>
    %cst_34 = arith.constant 0.000000e+00 : f32
    %84 = vector.broadcast %cst_34 : f32 to vector<8x1xf32>
    %85 = arith.select %83, %84, %81 : vector<8x1xi1>, vector<8x1xf32>
    %86 = vector.broadcast %85 : vector<8x1xf32> to vector<8x32xf32>
    %87 = arith.mulf %33, %86 : vector<8x32xf32>
    %c0_35 = arith.constant 0 : index
    %c0_36 = arith.constant 0 : index
    %88 = vector.load %arg3[%c0_35, %c0_36] : memref<8x32xf32, #tpu.memory_space<vmem>>, vector<8x32xf32>
    tpu.vector_store %arg3[%c0_35, %c0_36], %87 {strides = array<i32>} : memref<8x32xf32, #tpu.memory_space<vmem>>, vector<8x32xf32>,
    return
  }
  func.func @transform_0(%arg0: i32) -> (i32, i32) {
    %c0_i32 = arith.constant 0 : i32
    %c0_i32_0 = arith.constant 0 : i32
    return %arg0, %c0_i32 : i32, i32
  }
  func.func @transform_1(%arg0: i32) -> (i32, i32) {
    %c0_i32 = arith.constant 0 : i32
    %c0_i32_0 = arith.constant 0 : i32
    %c0_i32_1 = arith.constant 0 : i32
    return %c0_i32, %c0_i32_0 : i32, i32
  }
  func.func @transform_2(%arg0: i32) -> (i32, i32) {
    %c0_i32 = arith.constant 0 : i32
    %c0_i32_0 = arith.constant 0 : i32
    return %arg0, %c0_i32 : i32, i32
  }
}

</mosaic_0001>

<llo_original>
// kernel: tpu_custom_call.1
$region0: #{tpu_custom_call.1}
  #allocation0 [shape = 'u32[]', space=smem, size = 0x4, offset = 0x4, fixed_abs, tag = 'smem constant byte address 0x4 - core index']
  #allocation1 [shape = 'u32[144,128]{1,0:T(1,128)}', space=vmem, size = 0x12000, scoped, tag = 'internal scratch']
  %s0 = inlined_call_operand.hbm [shape: f32[16,32], index: 0, kind: input, shape index: {}]
  %s1 = inlined_call_operand.hbm [shape: f32[32,32], index: 1, kind: input, shape index: {}]
  %s2 = inlined_call_operand.hbm [shape: f32[16,32], index: 2, kind: output, shape index: {}]
  %s3 = sld [smem:[#allocation0]]
  $region49: #{tpu_custom_call.1} parent=0
    _
  %s5 = ssub.s32 1, %s3
  %s6 = scalar_select 0, %s5, %s3
  $region1: #{tpu_custom_call.1} parent=0
    #allocation2 [shape = 'u8[8192]{0}', space=vmem, size = 0x2000, scoped, tag = 'input window, operand 0']
    #allocation3 [shape = 's32[2]{0}', space=sflag, size = 0x8, scoped, tag = 'scoped memory for tpu_custom_call.1']
    #allocation4 [shape = 's32[2]{0}', space=sflag, size = 0x8, scoped, tag = 'scoped memory for tpu_custom_call.1']
    #allocation5 [shape = 'u8[16384]{0}', space=vmem, size = 0x4000, scoped, tag = 'input window, operand 1, single buffered']
    #allocation6 [shape = 's32[1]{0}', space=sflag, size = 0x4, scoped, tag = 'scoped memory for tpu_custom_call.1']
    #allocation7 [shape = 'u8[8192]{0}', space=vmem, size = 0x2000, scoped, tag = 'output window, operand 0']
    %7 = vsyncpa [#allocation3], 0
    %s8 = scalar_lea.sflag [#allocation3], 1
    %9 = vsyncpa %s8, 0
    %10 = vsyncpa [#allocation6], 0
    %11 = vsyncpa [#allocation4], 0
    %s12 = scalar_lea.sflag [#allocation4], 1
    %13 = vsyncpa %s12, 0
    loop: start=0, step=1, limit=4
    $region2: #{tpu_custom_call.1} parent=1 // loop_pre_header
      _
    $region3: #{tpu_custom_call.1} parent=1 // loop_header
      %s15 = sphi 0, %s19
      %p16 = scmp.ge.s32.totalorder %s15, 4
      %s25 = sphi 0, %s27
      %s28 = sphi 0, %s25
      %s29 = sphi 0, %s28
      %s45 = sphi 0, %s29
      %s49 = sphi 0, %s49
      %s51 = sphi 0, %s49
      %s52 = sphi 0, %s51
      %s66 = sphi 0, %s52
      %s72 = sphi 0, %s74
      %s75 = sphi 0, %s72
      %s76 = sphi 0, %s75
      %s92 = sphi 0, %s76
    $region4: #{tpu_custom_call.1} parent=1 // loop_header_branch
      %18 = sbr.rel (%p16) target = $region8
    $region5: #{tpu_custom_call.1} parent=1 // loop_body
      %s20 = ssub.s32 %s15, 1
      %s21 = ssub.s32 %s15, 2
      %s22 = sadd.s32 %s15, 1
      %s23 = ssub.s32 %s15, %s22
      %p24 = scmp.eq.s32.totalorder %s23, 0
      %s26 = sadd.s32 %s25, 1
      %s27 = scalar_select %p24, %s25, %s26
      %p30 = pneg %p24
      %p31 = scmp.eq.s32.totalorder %s15, 1
      %p32 = por %p30, %p31
      %p33 = scmp.ne.s32.totalorder %s25, %s28
      %p34 = scmp.eq.s32.totalorder %s15, 0
      %p35 = por %p33, %p34
      %p36 = scmp.ne.s32.totalorder %s25, %s28
      %p37 = scmp.eq.s32.totalorder %s20, 1
      %p38 = por %p36, %p37
      %p39 = scmp.ne.s32.totalorder %s28, %s29
      %p40 = scmp.eq.s32.totalorder %s20, 0
      %p41 = por %p39, %p40
      %p42 = scmp.ne.s32.totalorder %s28, %s29
      %p43 = scmp.eq.s32.totalorder %s21, 1
      %p44 = por %p42, %p43
      %p46 = scmp.ne.s32.totalorder %s29, %s45
      %p47 = scmp.eq.s32.totalorder %s21, 0
      %p48 = por %p46, %p47
      %s50 = sadd.s32 %s49, 1
      %p53 = scmp.eq.s32.totalorder %s15, 1
      %p54 = scmp.ne.s32.totalorder %s49, %s51
      %p55 = scmp.eq.s32.totalorder %s15, 0
      %p56 = por %p54, %p55
      %p57 = scmp.ne.s32.totalorder %s49, %s51
      %p58 = scmp.eq.s32.totalorder %s20, 1
      %p59 = por %p57, %p58
      %p60 = scmp.ne.s32.totalorder %s51, %s52
      %p61 = scmp.eq.s32.totalorder %s20, 0
      %p62 = por %p60, %p61
      %p63 = scmp.ne.s32.totalorder %s51, %s52
      %p64 = scmp.eq.s32.totalorder %s21, 1
      %p65 = por %p63, %p64
      %p67 = scmp.ne.s32.totalorder %s52, %s66
      %p68 = scmp.eq.s32.totalorder %s21, 0
      %p69 = por %p67, %p68
      %s70 = ssub.s32 %s15, %s22
      %p71 = scmp.eq.s32.totalorder %s70, 0
      %s73 = sadd.s32 %s72, 1
      %s74 = scalar_select %p71, %s72, %s73
      %p77 = pneg %p71
      %p78 = scmp.eq.s32.totalorder %s15, 1
      %p79 = por %p77, %p78
      %p80 = scmp.ne.s32.totalorder %s72, %s75
      %p81 = scmp.eq.s32.totalorder %s15, 0
      %p82 = por %p80, %p81
      %p83 = scmp.ne.s32.totalorder %s72, %s75
      %p84 = scmp.eq.s32.totalorder %s20, 1
      %p85 = por %p83, %p84
      %p86 = scmp.ne.s32.totalorder %s75, %s76
      %p87 = scmp.eq.s32.totalorder %s20, 0
      %p88 = por %p86, %p87
      %p89 = scmp.ne.s32.totalorder %s75, %s76
      %p90 = scmp.eq.s32.totalorder %s21, 1
      %p91 = por %p89, %p90
      %p93 = scmp.ne.s32.totalorder %s76, %s92
      %p94 = scmp.eq.s32.totalorder %s21, 0
      %p95 = por %p93, %p94
      %p96 = scmp.le.s32.totalorder 1, %s15
      %p97 = scmp.lt.s32.totalorder %s15, 3
      %p98 = pnand %p96, %p97
      %p99 = pneg %p98
      // Predicated region
      $region9: #{tpu_custom_call.1} parent=5 // pred_check
        _
      $region10: #{tpu_custom_call.1} parent=5 // pred_check_branch
        %101 = sbr.rel (%p98) target = $region12
      $region11: #{tpu_custom_call.1} parent=5 // pred_region
        %s102 = ssub.s32 %s15, 1
        // Predicated region
        $region13: #{tpu_custom_call.1} parent=11 // pred_check
          %p103 = pneg %p62
        $region14: #{tpu_custom_call.1} parent=11 // pred_check_branch
          %105 = sbr.rel (%p103) target = $region16
        $region15: #{tpu_custom_call.1} parent=11 // pred_region
          %s107 = ssub.s32 512, 512
          %108 = vsyncadd [#allocation6], %s107
          %s109 = sshll.u32 [#allocation5], 4
          %s110 = int_to_ptr.vmem [resolvable:$true] %s109
          %115 = dma.hbm_to_vmem [thread:$0]  %s1, 512, %s110, [#allocation6], 128, 128, 8
        $region16: #{tpu_custom_call.1} parent=11 // pred_fallthru
          _
      $region12: #{tpu_custom_call.1} parent=5 // pred_fallthru
        _
      %p116 = scmp.lt.s32.totalorder %s15, 2
      // Predicated region
      $region17: #{tpu_custom_call.1} parent=5 // pred_check
        %p117 = pneg %p116
      $region18: #{tpu_custom_call.1} parent=5 // pred_check_branch
        %119 = sbr.rel (%p117) target = $region20
      $region19: #{tpu_custom_call.1} parent=5 // pred_region
        // Predicated region
        $region21: #{tpu_custom_call.1} parent=19 // pred_check
          %p120 = pneg %p35
        $region22: #{tpu_custom_call.1} parent=19 // pred_check_branch
          %122 = sbr.rel (%p120) target = $region24
        $region23: #{tpu_custom_call.1} parent=19 // pred_region
          %s123 = sand.u32 %s25, 1
          %s124 = scalar_lea.sflag [#allocation3], %s123
          %s125 = sand.u32 %s25, 1
          %s126 = smul.addr %s125, 8
          %s127 = scalar_lea.vmem [#allocation2], %s126
          %s129 = ssub.s32 128, 128
          %130 = vsyncadd %s124, %s129
          %s131 = smul.addr %s15, 128
          %s132 = scalar_lea.hbm %s0, %s131
          %s134 = sshll.u32 %s127, 4
          %s135 = int_to_ptr.vmem [resolvable:$true] %s134
          %137 = dma.hbm_to_vmem [thread:$0]  %s132, 128, %s135, %s124
        $region24: #{tpu_custom_call.1} parent=19 // pred_fallthru
          _
      $region20: #{tpu_custom_call.1} parent=5 // pred_fallthru
        _
      %p138 = scmp.le.s32.totalorder 1, %s15
      %p139 = scmp.lt.s32.totalorder %s15, 3
      %p140 = pnand %p138, %p139
      %p141 = pneg %p140
      // Predicated region
      $region25: #{tpu_custom_call.1} parent=5 // pred_check
        _
      $region26: #{tpu_custom_call.1} parent=5 // pred_check_branch
        %143 = sbr.rel (%p140) target = $region28
      $region27: #{tpu_custom_call.1} parent=5 // pred_region
        %s144 = ssub.s32 %s15, 1
        %s145 = sand.u32 %s28, 1
        %s146 = scalar_lea.sflag [#allocation3], %s145
        %s147 = sand.u32 %s28, 1
        %s148 = smul.addr %s147, 8
        %s149 = scalar_lea.vmem [#allocation2], %s148
        // Predicated region
        $region29: #{tpu_custom_call.1} parent=27 // pred_check
          %p150 = pneg %p41
        $region30: #{tpu_custom_call.1} parent=27 // pred_check_branch
          %152 = sbr.rel (%p150) target = $region32
        $region31: #{tpu_custom_call.1} parent=27 // pred_region
          %153 = dma.done %s146, 128
        $region32: #{tpu_custom_call.1} parent=27 // pred_fallthru
          _
        // Predicated region
        $region33: #{tpu_custom_call.1} parent=27 // pred_check
          %p154 = pneg %p62
        $region34: #{tpu_custom_call.1} parent=27 // pred_check_branch
          %156 = sbr.rel (%p154) target = $region36
        $region35: #{tpu_custom_call.1} parent=27 // pred_region
          %157 = dma.done [#allocation6], 512
        $region36: #{tpu_custom_call.1} parent=27 // pred_fallthru
          _
        %s158 = sand.u32 %s28, 1
        %s159 = scalar_lea.sflag [#allocation3], %s158
        %s160 = sand.u32 %s28, 1
        %s161 = smul.addr %s160, 8
        %s162 = scalar_lea.vmem [#allocation2], %s161
        %p163 = pneg %p41
        %p164 = pneg %p38
        %p165 = pneg %p62
        %p166 = pneg %p59
        %p167 = pneg %p88
        %p168 = pneg %p85
        %s169 = sand.u32 %s75, 1
        %s170 = scalar_lea.sflag [#allocation4], %s169
        %s171 = sand.u32 %s75, 1
        %s172 = smul.addr %s171, 8
        %s173 = scalar_lea.vmem [#allocation7], %s172
        %v174 = vld [vmem:[%s149] sm:$0xff]
        %v175 = vmul.f32 %v174, %v174
        %vm176 = vcmask 261120
        %v177 = vsel %vm176, %v175, 0.0
        %178 = vadd.xlane.f32.xlu0 %v177
        %v179 = vpop.xlane.xlu0 %178
        %v180 = vmax.f32 %v179, 1e-10
        %v181 = vrsqrt.pop %v180
        %v182 = vmul.f32 %v179, %v181
        %v183 = vmax.f32 %v182, 1e-05
        %v184 = vmin.f32 %v181, 100000.0
        %v185 = vmul.f32 %v183, 1.5811388
        %v186 = vmax.f32 %v185, -15.0
        %v187 = vmin.f32 %v186, 15.0
        %v188 = vtanh.pop %v187
        %v189 = vmul.f32 %v188, %v184
        %v190 = vmul.f32 %v189, 0.6324555
        %v191 = vmul.f32 %v174, %v190
        %v192 = vmax.f32 %v188, 1.5811389e-05
        %v193 = vrcp.pop %v192
        %v194 = vmul.f32 1.5811388, %v193
        %v195 = vmin.f32 %v185, 6.103034
        %v196 = vld [vmem:[#allocation5] sm:$0xff]
        %v197 = vld [vmem:[#allocation5 + $0x8] sm:$0xff]
        %v198 = vld [vmem:[#allocation5 + $0x10] sm:$0xff]
        %v199 = vld [vmem:[#allocation5 + $0x18] sm:$0xff]
        %v201 = vsel %vm176, %v191, 0
        %203 = vmatprep.subr.mxu0 0.0
        %204 = vmatpush1.msra.mxu0 %v196
        %205 = vmatprep.subr.mxu0 0.0
        %206 = vmatpush1.msra.mxu0 %v197
        %207 = vmatprep.subr.mxu0 0.0
        %208 = vmatpush1.msra.mxu0 %v198
        %209 = vmatprep.subr.mxu0 0.0
        %210 = vmatpush1.msra.mxu0 %v199
        %211 = vmatprep.subr.mxu0 0.0
        %212 = vmatpush1.msra.mxu0 0.0
        %213 = vmatprep.subr.mxu0 0.0
        %214 = vmatpush1.msra.mxu0 0.0
        %215 = vmatprep.subr.mxu0 0.0
        %216 = vmatpush1.msra.mxu0 0.0
        %217 = vmatprep.subr.mxu0 0.0
        %218 = vmatpush1.msra.mxu0 0.0
        %219 = vmatprep.subr.mxu0 0.0
        %220 = vmatpush1.msra.mxu0 0.0
        %221 = vmatprep.subr.mxu0 0.0
        %222 = vmatpush1.msra.mxu0 0.0
        %223 = vmatprep.subr.mxu0 0.0
        %224 = vmatpush1.msra.mxu0 0.0
        %225 = vmatprep.subr.mxu0 0.0
        %226 = vmatpush1.msra.mxu0 0.0
        %227 = vmatprep.subr.mxu0 0.0
        %228 = vmatpush1.msra.mxu0 0.0
        %229 = vmatprep.subr.mxu0 0.0
        %230 = vmatpush1.msra.mxu0 0.0
        %231 = vmatprep.subr.mxu0 0.0
        %232 = vmatpush1.msra.mxu0 0.0
        %233 = vmatprep.subr.mxu0 0.0
        %234 = vmatpush1.msra.mxu0 0.0
        %235 = vmatprep.subr.mxu0 0.0
        %236 = vmatpush1.msra.mxu0 0.0
        %237 = vmatprep.subr.mxu0 0.0
        %238 = vmatpush1.msra.mxu0 0.0
        %239 = vmatprep.subr.mxu0 0.0
        %240 = vmatpush1.msra.mxu0 0.0
        %241 = vmatprep.subr.mxu0 0.0
        %242 = vmatpush1.msra.mxu0 0.0
        %243 = vmatprep.subr.mxu0 0.0
        %244 = vmatpush1.msra.mxu0 0.0
        %245 = vmatprep.subr.mxu0 0.0
        %246 = vmatpush1.msra.mxu0 0.0
        %247 = vmatprep.subr.mxu0 0.0
        %248 = vmatpush1.msra.mxu0 0.0
        %249 = vmatprep.subr.mxu0 0.0
        %250 = vmatpush1.msra.mxu0 0.0
        %251 = vmatprep.subr.mxu0 0.0
        %252 = vmatpush1.msra.mxu0 0.0
        %253 = vmatprep.subr.mxu0 0.0
        %254 = vmatpush1.msra.mxu0 0.0
        %255 = vmatprep.subr.mxu0 0.0
        %256 = vmatpush1.msra.mxu0 0.0
        %257 = vmatprep.subr.mxu0 0.0
        %258 = vmatpush1.msra.mxu0 0.0
        %259 = vmatprep.subr.mxu0 0.0
        %260 = vmatpush1.msra.mxu0 0.0
        %261 = vmatprep.subr.mxu0 0.0
        %262 = vmatpush1.msra.mxu0 0.0
        %263 = vmatprep.subr.mxu0 0.0
        %264 = vmatpush1.msra.mxu0 0.0
        %265 = vmatprep.subr.mxu0 0.0
        %266 = vmatpush1.msra.mxu0 0.0
        %267 = vmatprep.mubr.f32.mxu0 0.0
        %268 = vmatmul.mubr.f32.gmra.mrb[0].mxu0 %v201
        %v269 = vpop.f32.mrb[0].mxu0
        %v270 = vadd.f32 0.0, %v269
        %v271 = vpop.f32.mrb[0].mxu0
        %272 = vdwg.mxu0
        %v273 = vmul.f32 %v270, %v270
        %v274 = vsel %vm176, %v273, 0.0
        %275 = vadd.xlane.f32.xlu0 %v274
        %v276 = vpop.xlane.xlu0 %275
        %v277 = vmax.f32 %v276, 1e-30
        %v278 = vrsqrt.pop %v277
        %v279 = vmul.f32 %v276, %v278
        %v280 = vmul.f32 %v279, %v194
        %v281 = vmul.f32 %v280, %v195
        %v282 = vmax.f32 %v281, -15.0
        %v283 = vmin.f32 %v282, 15.0
        %v284 = vtanh.pop %v283
        %v285 = vmul.f32 %v284, %v278
        %v286 = vmul.f32 %v285, 0.6324555
        %v287 = vmul.f32 %v284, 0.6324555
        %v288 = vmax.f32 %v287, 1e-05
        %v289 = vmin.f32 %v288, 0.63182306
        %vm290 = vcmp.gt.f32.partialorder %v288, 0.63182306
        %v291 = vrcp.pop %v288
        %v292 = vmul.f32 0.63182306, %v291
        %v293 = vsel %vm290, %v292, 1.0
        %v294 = vmul.f32 %v289, 1.5811388
        %v295 = vmax.f32 %v294, -0.99999
        %v296 = vmin.f32 %v295, 0.99999
        %v297 = vadd.f32 %v296, 1.0
        %v298 = vsub.f32 1.0, %v296
        %v299 = vrcp.pop %v298
        %v300 = vmul.f32 %v297, %v299
        %v301 = vlog2.pop %v300
        %v302 = vmul.f32 %v301, 0.6931472
        %v303 = vmul.f32 %v302, 0.5
        %v304 = vrcp.pop %v294
        %v305 = vmul.f32 %v303, %v304
        %v306 = vmul.f32 %v286, %v293
        %v307 = vmul.f32 %v306, %v305
        %vm308 = vcmp.eq.f32.partialorder %v276, 0.0
        %v309 = vsel %vm308, 0.0, %v307
        %v310 = vmul.f32 %v270, %v309
        %311 = vst.msk [vmem:[%s173] sm:$0xff] %vm176, %v310
        %s312 = sand.u32 %s75, 1
        %s313 = scalar_lea.sflag [#allocation4], %s312
        %s314 = sand.u32 %s75, 1
        %s315 = smul.addr %s314, 8
        %s316 = scalar_lea.vmem [#allocation7], %s315
        // Predicated region
        $region37: #{tpu_custom_call.1} parent=27 // pred_check
          %p317 = pneg %p85
        $region38: #{tpu_custom_call.1} parent=27 // pred_check_branch
          %319 = sbr.rel (%p317) target = $region40
        $region39: #{tpu_custom_call.1} parent=27 // pred_region
          %s321 = ssub.s32 128, 128
          %322 = vsyncadd %s313, %s321
          %s323 = smul.addr %s20, 128
          %s324 = scalar_lea.hbm %s2, %s323
          %s326 = sshll.u32 %s316, 4
          %s327 = int_to_ptr.vmem [resolvable:$true] %s326
          %329 = dma.vmem_to_hbm [thread:$0]  %s327, 128, %s324, %s313
        $region40: #{tpu_custom_call.1} parent=27 // pred_fallthru
          _
      $region28: #{tpu_custom_call.1} parent=5 // pred_fallthru
        _
      %p330 = scmp.le.s32.totalorder 2, %s15
      // Predicated region
      $region41: #{tpu_custom_call.1} parent=5 // pred_check
        %p331 = pneg %p330
      $region42: #{tpu_custom_call.1} parent=5 // pred_check_branch
        %333 = sbr.rel (%p331) target = $region44
      $region43: #{tpu_custom_call.1} parent=5 // pred_region
        %s334 = ssub.s32 %s15, 2
        // Predicated region
        $region45: #{tpu_custom_call.1} parent=43 // pred_check
          %p335 = pneg %p91
        $region46: #{tpu_custom_call.1} parent=43 // pred_check_branch
          %337 = sbr.rel (%p335) target = $region48
        $region47: #{tpu_custom_call.1} parent=43 // pred_region
          %s338 = sand.u32 %s76, 1
          %s339 = scalar_lea.sflag [#allocation4], %s338
          %s340 = sand.u32 %s76, 1
          %s341 = smul.addr %s340, 8
          %s342 = scalar_lea.vmem [#allocation7], %s341
          %343 = dma.done %s339, 128
        $region48: #{tpu_custom_call.1} parent=43 // pred_fallthru
          _
      $region44: #{tpu_custom_call.1} parent=5 // pred_fallthru
        _
    $region6: #{tpu_custom_call.1} parent=1 // loop_footer
      %s19 = sadd.s32 1, %s15
    $region7: #{tpu_custom_call.1} parent=1 // loop_footer_branch
      %14 = sbr.rel target = $region3
    $region8: #{tpu_custom_call.1} parent=1 // loop_exit
      _
    %344 = vsyncpa [#allocation3], 1
    %s345 = scalar_lea.sflag [#allocation3], 1
    %346 = vsyncpa %s345, 1
    %347 = vsyncpa [#allocation6], 1
    %348 = vsyncpa [#allocation4], 1
    %s349 = scalar_lea.sflag [#allocation4], 1
    %350 = vsyncpa %s349, 1

</llo_original>
